<compile_context>
chip_gen: v6e
topology: v6e:2x2x1
jax: 0.10.0
libtpu: 0.0.40
codegen_flags: <defaults>
</compile_context>

<pallas_src>
import functools

import jax
import jax.numpy as jnp
from jax.experimental import pallas as pl
from jax.experimental.pallas import tpu as pltpu


def _round_up(a, b):
    return ((a + b - 1) // b) * b


# ---------------------------------------------------------------------------
# Pre-pass kernel: stochastic masking of the weight update.
# Runs ONCE per forward over the (K_p, N_p) weight slab (tiny vs. the GEMM).
#   binary: mask = clip(floor(update/noise + u), 0, 1)
#   signed: mask = clip(floor((update/noise + 1)/2 + u), 0, 1) * 2 - 1
#   w_eff  = weight + noise * mask
# ---------------------------------------------------------------------------
def _mask_weight_kernel(w_ref, noise_ref, update_ref, rand_ref, weff_ref, *, mask_type):
    noise = noise_ref[...]
    update = update_ref[...]
    u = rand_ref[...]
    # Exact f32 divide: floor() is numerically sensitive at integer boundaries.
    r = update / noise
    if mask_type == "binary":
        mask = jnp.clip(jnp.floor(r + u), 0.0, 1.0)
    elif mask_type == "signed":
        mask = jnp.clip(jnp.floor((r + 1.0) * 0.5 + u), 0.0, 1.0) * 2.0 - 1.0
    else:
        raise ValueError("unsupported mask type")
    weff_ref[...] = (w_ref[...] + noise * mask).astype(weff_ref.dtype)


# ---------------------------------------------------------------------------
# Main kernel: tiled GEMM  patches(M, K) @ w_eff(K, N)  with f32 VMEM accumulator.
# Grid = (M/tm, N/tn, K/tk); K innermost (reduction), init at k==0, writeback at k==last.
# ---------------------------------------------------------------------------
def _gemm_kernel(x_ref, w_ref, o_ref, acc_ref):
    k = pl.program_id(2)

    @pl.when(k == 0)
    def _():
        acc_ref[...] = jnp.zeros_like(acc_ref)

    # Contraction over the leading dim of the RHS tile; lane-dense (tm, tn) output.
    acc_ref[...] += jax.lax.dot_general(
        x_ref[...], w_ref[...],
        dimension_numbers=(((1,), (0,)), ((), ())),
        preferred_element_type=jnp.float32,
    )

    @pl.when(k == pl.num_programs(2) - 1)
    def _():
        o_ref[...] = acc_ref[...].astype(o_ref.dtype)


def _im2col(x, KH, KW, stride, padding):
    """Extract conv patches. Returns (B*OH*OW, Cin*KH*KW) with feature order (c, kh, kw),
    matching weight.reshape(Cout, Cin*KH*KW)."""
    B, C, H, W = x.shape
    x_p = jnp.pad(x, ((0, 0), (0, 0), (padding, padding), (padding, padding)))
    OH = (H + 2 * padding - KH) // stride + 1
    OW = (W + 2 * padding - KW) // stride + 1
    cols = []
    for kh in range(KH):
        for kw in range(KW):
            cols.append(
                x_p[:, :,
                    kh:kh + stride * (OH - 1) + 1:stride,
                    kw:kw + stride * (OW - 1) + 1:stride])        # (B, C, OH, OW)
    p = jnp.stack(cols, axis=2)                                   # (B, C, KH*KW, OH, OW)
    p = p.reshape(B, C * KH * KW, OH, OW)                         # idx = c*KH*KW + kh*KW + kw
    p = p.transpose(0, 2, 3, 1).reshape(B * OH * OW, C * KH * KW)
    return p, OH, OW


def srn_conv2d_forward(x, weight, noise, update, *, stride=1, padding=0,
                       mask_type="binary", rng_key=None,
                       compute_dtype=jnp.float32,
                       tm_max=1024, tn_max=256, tk_max=512):
    if rng_key is None:
        rng_key = jax.random.PRNGKey(0)

    B, C_in, H, W = x.shape
    C_out, _, KH, KW = weight.shape

    # One uniform draw per weight element per forward (the torch.rand_like equivalent).
    rand_u = jax.random.uniform(rng_key, weight.shape, dtype=jnp.float32)

    # --- layout plumbing (outside the kernels) ---
    patches, OH, OW = _im2col(x, KH, KW, stride, padding)
    M, K = patches.shape
    N = C_out

    def to_kn(a):                       # (Cout, Cin, KH, KW) -> (K, N)
        return a.reshape(C_out, K).T.astype(jnp.float32)

    w_kn, n_kn, u_kn, r_kn = to_kn(weight), to_kn(noise), to_kn(update), to_kn(rand_u)

    # Tile sizes: multiples of (8, 128); ~8 MiB double-buffered at the maxima, well under
    # the explicit 32 MiB scoped-VMEM limit below (safe on v5e 16 MiB default / v7x 64 MiB
    # physical).
    tm = min(tm_max, _round_up(M, 8))
    tn = min(tn_max, _round_up(N, 128))
    tk = min(tk_max, _round_up(K, 128))
    M_p, N_p, K_p = _round_up(M, tm), _round_up(N, tn), _round_up(K, tk)

    patches = jnp.pad(patches, ((0, M_p - M), (0, K_p - K))).astype(compute_dtype)
    w_kn = jnp.pad(w_kn, ((0, K_p - K), (0, N_p - N)))
    u_kn = jnp.pad(u_kn, ((0, K_p - K), (0, N_p - N)))
    r_kn = jnp.pad(r_kn, ((0, K_p - K), (0, N_p - N)))
    # Pad noise with 1.0 so update/noise stays finite on padded elements (zero patches make
    # padded-K contributions vanish; padded-N columns are sliced off below).
    n_kn = jnp.pad(n_kn, ((0, K_p - K), (0, N_p - N)), constant_values=1.0)

    # --- pre-pass: materialize w_eff ONCE (K*N elements; removes noise/update/PRNG from
    #     the GEMM hot loop) ---
    tkw = min(512, K_p)
    tnw = min(256, N_p)
    w_eff = pl.pallas_call(
        functools.partial(_mask_weight_kernel, mask_type=mask_type),
        out_shape=jax.ShapeDtypeStruct((K_p, N_p), compute_dtype),
        grid_spec=pltpu.PrefetchScalarGridSpec(
            num_scalar_prefetch=0,
            grid=(K_p // tkw, N_p // tnw),
            in_specs=[pl.BlockSpec((tkw, tnw), lambda i, j: (i, j))] * 4,
            out_specs=pl.BlockSpec((tkw, tnw), lambda i, j: (i, j)),
        ),
        compiler_params=pltpu.CompilerParams(
            dimension_semantics=("parallel", "parallel")),
    )(w_kn, n_kn, u_kn, r_kn)

    # --- main GEMM: patches @ w_eff ---
    grid = (M_p // tm, N_p // tn, K_p // tk)
    out_p = pl.pallas_call(
        _gemm_kernel,
        out_shape=jax.ShapeDtypeStruct((M_p, N_p), x.dtype),
        grid_spec=pltpu.PrefetchScalarGridSpec(
            num_scalar_prefetch=0,
            grid=grid,
            in_specs=[
                pl.BlockSpec((tm, tk), lambda i, j, k: (i, k)),   # patches (M, K)
                pl.BlockSpec((tk, tn), lambda i, j, k: (k, j)),   # w_eff   (K, N)
            ],
            out_specs=pl.BlockSpec((tm, tn), lambda i, j, k: (i, j)),
            scratch_shapes=[pltpu.VMEM((tm, tn), jnp.float32)],
        ),
        compiler_params=pltpu.CompilerParams(
            dimension_semantics=("parallel", "parallel", "arbitrary"),
            vmem_limit_bytes=32 * 1024 * 1024),
    )(patches, w_eff)

    out = out_p[:M, :N]                                   # (B*OH*OW, Cout)
    return out.reshape(B, OH, OW, C_out).transpose(0, 3, 1, 2)


if __name__ == "__main__":
    key = jax.random.PRNGKey(0)
    k_x, k_w, k_n, k_s, k_u = jax.random.split(key, 5)

    B, C_in, C_out, H, W, KS = 2, 4, 8, 16, 16, 3
    stride, padding = 1, 1

    x = jax.random.normal(k_x, (B, C_in, H, W), dtype=jnp.float32)

    # Parameter init mirroring the module: weight/noise ~ N(0, 0.01), noise kept away
    # from zero (same guard as set_parameters).
    weight = 0.01 * jax.random.normal(k_w, (C_out, C_in, KS, KS), dtype=jnp.float32)
    noise = 0.01 * jax.random.normal(k_n, (C_out, C_in, KS, KS), dtype=jnp.float32)
    noise = jnp.where(jnp.abs(noise) < 1e-8, 1e-8, noise)

    # Choose `update` so the stochastic binary mask is deterministic regardless of the
    # uniform draw (u in [0,1)):  update/noise = +1.5 -> mask = 1,  -1.5 -> mask = 0.
    # This exercises the masking kernel's floor/clip path while keeping an exact reference.
    sign = jnp.where(jax.random.bernoulli(k_s, 0.5, noise.shape), 1.0, -1.0)
    update = 1.5 * sign * noise
    expected_mask = (sign > 0).astype(jnp.float32)

    out = srn_conv2d_forward(x, weight, noise, update,
                             stride=stride, padding=padding,
                             mask_type="binary", rng_key=k_u)
    out = jax.block_until_ready(out)

    w_eff_ref = weight + noise * expected_mask
    ref = jax.lax.conv_general_dilated(
        x, w_eff_ref,
        window_strides=(stride, stride),
        padding=((padding, padding), (padding, padding)),
        dimension_numbers=("NCHW", "OIHW", "NCHW"),
        precision=jax.lax.Precision.HIGHEST)

    OH = (H + 2 * padding - KS) // stride + 1
    OW = (W + 2 * padding - KS) // stride + 1
    assert out.shape == (B, C_out, OH, OW)
    assert jnp.allclose(out, ref, atol=1e-4, rtol=1e-4), float(jnp.max(jnp.abs(out - ref)))

    print("KERNEL_OK")
</pallas_src>

<mosaic_0001>
module attributes {stable_mosaic.version = 11 : i64} {
  func.func @_mask_weight_kernel(%arg0: i32, %arg1: i32, %arg2: memref<128x128xf32, #tpu.memory_space<vmem>>, %arg3: memref<128x128xf32, #tpu.memory_space<vmem>>, %arg4: memref<128x128xf32, #tpu.memory_space<vmem>>, %arg5: memref<128x128xf32, #tpu.memory_space<vmem>>, %arg6: memref<128x128xf32, #tpu.memory_space<vmem>>) attributes {dimension_semantics = [#tpu.dimension_semantics<parallel>, #tpu.dimension_semantics<parallel>], iteration_bounds = array<i64: 1, 1>, scalar_prefetch = 0 : i64, scratch_operands = 0 : i64, tpu.core_type = #tpu.core_type<tc>, window_params = [{transform_indices = @transform_0, window_bounds = array<i64: 128, 128>}, {transform_indices = @transform_1, window_bounds = array<i64: 128, 128>}, {transform_indices = @transform_2, window_bounds = array<i64: 128, 128>}, {transform_indices = @transform_3, window_bounds = array<i64: 128, 128>}, {transform_indices = @transform_4, window_bounds = array<i64: 128, 128>}]} {
    %c0 = arith.constant 0 : index
    %c0_0 = arith.constant 0 : index
    %0 = vector.load %arg3[%c0, %c0_0] : memref<128x128xf32, #tpu.memory_space<vmem>>, vector<128x128xf32>
    %c0_1 = arith.constant 0 : index
    %c0_2 = arith.constant 0 : index
    %1 = vector.load %arg4[%c0_1, %c0_2] : memref<128x128xf32, #tpu.memory_space<vmem>>, vector<128x128xf32>
    %c0_3 = arith.constant 0 : index
    %c0_4 = arith.constant 0 : index
    %2 = vector.load %arg5[%c0_3, %c0_4] : memref<128x128xf32, #tpu.memory_space<vmem>>, vector<128x128xf32>
    %3 = arith.divf %1, %0 : vector<128x128xf32>
    %4 = arith.addf %3, %2 : vector<128x128xf32>
    %5 = math.floor %4 : vector<128x128xf32>
    %cst = arith.constant 0.000000e+00 : f32
    %cst_5 = arith.constant 1.000000e+00 : f32
    %6 = vector.broadcast %cst : f32 to vector<128x128xf32>
    %7 = arith.maximumf %6, %5 : vector<128x128xf32>
    %8 = vector.broadcast %cst_5 : f32 to vector<128x128xf32>
    %9 = arith.minimumf %8, %7 : vector<128x128xf32>
    %c0_6 = arith.constant 0 : index
    %c0_7 = arith.constant 0 : index
    %10 = vector.load %arg2[%c0_6, %c0_7] : memref<128x128xf32, #tpu.memory_space<vmem>>, vector<128x128xf32>
    %11 = arith.mulf %0, %9 : vector<128x128xf32>
    %12 = arith.addf %10, %11 : vector<128x128xf32>
    %c0_8 = arith.constant 0 : index
    %c0_9 = arith.constant 0 : index
    %13 = vector.load %arg6[%c0_8, %c0_9] : memref<128x128xf32, #tpu.memory_space<vmem>>, vector<128x128xf32>
    tpu.vector_store %arg6[%c0_8, %c0_9], %12 {strides = array<i32>} : memref<128x128xf32, #tpu.memory_space<vmem>>, vector<128x128xf32>,
    return
  }
  func.func @transform_0(%arg0: i32, %arg1: i32) -> (i32, i32) {
    %c0_i32 = arith.constant 0 : i32
    return %arg0, %arg1 : i32, i32
  }
  func.func @transform_1(%arg0: i32, %arg1: i32) -> (i32, i32) {
    %c0_i32 = arith.constant 0 : i32
    return %arg0, %arg1 : i32, i32
  }
  func.func @transform_2(%arg0: i32, %arg1: i32) -> (i32, i32) {
    %c0_i32 = arith.constant 0 : i32
    return %arg0, %arg1 : i32, i32
  }
  func.func @transform_3(%arg0: i32, %arg1: i32) -> (i32, i32) {
    %c0_i32 = arith.constant 0 : i32
    return %arg0, %arg1 : i32, i32
  }
  func.func @transform_4(%arg0: i32, %arg1: i32) -> (i32, i32) {
    %c0_i32 = arith.constant 0 : i32
    return %arg0, %arg1 : i32, i32
  }
}

</mosaic_0001>

<llo_original>
// kernel: tpu_custom_call.1
$region0: #{tpu_custom_call.1}
  #allocation0 [shape = 'u32[]', space=smem, size = 0x4, offset = 0x4, fixed_abs, tag = 'smem constant byte address 0x4 - core index']
  #allocation1 [shape = 'u32[144,128]{1,0:T(1,128)}', space=vmem, size = 0x12000, scoped, tag = 'internal scratch']
  %s0 = inlined_call_operand.hbm [shape: f32[128,128], index: 0, kind: input, shape index: {}]
  %s1 = inlined_call_operand.hbm [shape: f32[128,128], index: 1, kind: input, shape index: {}]
  %s2 = inlined_call_operand.hbm [shape: f32[128,128], index: 2, kind: input, shape index: {}]
  %s3 = inlined_call_operand.hbm [shape: f32[128,128], index: 3, kind: input, shape index: {}]
  %s4 = inlined_call_operand.hbm [shape: f32[128,128], index: 4, kind: output, shape index: {}]
  %s5 = sld [smem:[#allocation0]]
  $region42: #{tpu_custom_call.1} parent=0
    _
  %s7 = ssub.s32 1, %s5
  %s8 = scalar_select 0, %s7, %s5
  $region1: #{tpu_custom_call.1} parent=0
    #allocation2 [shape = 'u8[65536]{0}', space=vmem, size = 0x10000, scoped, tag = 'input window, operand 0, single buffered']
    #allocation3 [shape = 's32[1]{0}', space=sflag, size = 0x4, scoped, tag = 'scoped memory for tpu_custom_call.1']
    #allocation4 [shape = 's32[1]{0}', space=sflag, size = 0x4, scoped, tag = 'scoped memory for tpu_custom_call.1']
    #allocation5 [shape = 'u8[65536]{0}', space=vmem, size = 0x10000, scoped, tag = 'input window, operand 1, single buffered']
    #allocation6 [shape = 's32[1]{0}', space=sflag, size = 0x4, scoped, tag = 'scoped memory for tpu_custom_call.1']
    #allocation7 [shape = 'u8[65536]{0}', space=vmem, size = 0x10000, scoped, tag = 'input window, operand 2, single buffered']
    #allocation8 [shape = 'u8[65536]{0}', space=vmem, size = 0x10000, scoped, tag = 'input window, operand 3, single buffered']
    #allocation9 [shape = 's32[1]{0}', space=sflag, size = 0x4, scoped, tag = 'scoped memory for tpu_custom_call.1']
    #allocation10 [shape = 'u8[65536]{0}', space=vmem, size = 0x10000, scoped, tag = 'output window, operand 0, single buffered']
    %9 = vsyncpa [#allocation3], 0
    %10 = vsyncpa [#allocation6], 0
    %11 = vsyncpa [#allocation9], 0
    %12 = vsyncpa [#allocation4], 0
    // Predicated region
    $region2: #{tpu_custom_call.1} parent=1 // pred_check
      _
    $region3: #{tpu_custom_call.1} parent=1 // pred_check_branch
      %14 = sbr.rel (0) target = $region5
    $region4: #{tpu_custom_call.1} parent=1 // pred_region
      %s16 = ssub.s32 2048, 2048
      %17 = vsyncadd [#allocation3], %s16
      %s18 = sshll.u32 [#allocation2], 4
      %s19 = int_to_ptr.vmem [resolvable:$true] %s18
      %24 = dma.hbm_to_vmem [thread:$0]  %s0, 2048, %s19, [#allocation3], 128, 128, 8
    $region5: #{tpu_custom_call.1} parent=1 // pred_fallthru
      _
    // Predicated region
    $region6: #{tpu_custom_call.1} parent=1 // pred_check
      _
    $region7: #{tpu_custom_call.1} parent=1 // pred_check_branch
      %26 = sbr.rel (0) target = $region9
    $region8: #{tpu_custom_call.1} parent=1 // pred_region
      %s28 = ssub.s32 2048, 2048
      %29 = vsyncadd [#allocation6], %s28
      %s30 = sshll.u32 [#allocation5], 4
      %s31 = int_to_ptr.vmem [resolvable:$true] %s30
      %36 = dma.hbm_to_vmem [thread:$0]  %s1, 2048, %s31, [#allocation6], 128, 128, 8
    $region9: #{tpu_custom_call.1} parent=1 // pred_fallthru
      _
    // Predicated region
    $region10: #{tpu_custom_call.1} parent=1 // pred_check
      _
    $region11: #{tpu_custom_call.1} parent=1 // pred_check_branch
      %38 = sbr.rel (0) target = $region13
    $region12: #{tpu_custom_call.1} parent=1 // pred_region
      %s40 = ssub.s32 2048, 2048
      %41 = vsyncadd [#allocation6], %s40
      %s42 = sshll.u32 [#allocation7], 4
      %s43 = int_to_ptr.vmem [resolvable:$true] %s42
      %48 = dma.hbm_to_vmem [thread:$0]  %s2, 2048, %s43, [#allocation6], 128, 128, 8
    $region13: #{tpu_custom_call.1} parent=1 // pred_fallthru
      _
    // Predicated region
    $region14: #{tpu_custom_call.1} parent=1 // pred_check
      _
    $region15: #{tpu_custom_call.1} parent=1 // pred_check_branch
      %50 = sbr.rel (0) target = $region17
    $region16: #{tpu_custom_call.1} parent=1 // pred_region
      %s52 = ssub.s32 2048, 2048
      %53 = vsyncadd [#allocation9], %s52
      %s54 = sshll.u32 [#allocation8], 4
      %s55 = int_to_ptr.vmem [resolvable:$true] %s54
      %60 = dma.hbm_to_vmem [thread:$0]  %s3, 2048, %s55, [#allocation9], 128, 128, 8
    $region17: #{tpu_custom_call.1} parent=1 // pred_fallthru
      _
    // Predicated region
    $region18: #{tpu_custom_call.1} parent=1 // pred_check
      _
    $region19: #{tpu_custom_call.1} parent=1 // pred_check_branch
      %62 = sbr.rel (0) target = $region21
    $region20: #{tpu_custom_call.1} parent=1 // pred_region
      %63 = dma.done [#allocation3], 2048
    $region21: #{tpu_custom_call.1} parent=1 // pred_fallthru
      _
    // Predicated region
    $region22: #{tpu_custom_call.1} parent=1 // pred_check
      _
    $region23: #{tpu_custom_call.1} parent=1 // pred_check_branch
      %65 = sbr.rel (0) target = $region25
    $region24: #{tpu_custom_call.1} parent=1 // pred_region
      %66 = dma.done [#allocation6], 2048
    $region25: #{tpu_custom_call.1} parent=1 // pred_fallthru
      _
    // Predicated region
    $region26: #{tpu_custom_call.1} parent=1 // pred_check
      _
    $region27: #{tpu_custom_call.1} parent=1 // pred_check_branch
      %68 = sbr.rel (0) target = $region29
    $region28: #{tpu_custom_call.1} parent=1 // pred_region
      %69 = dma.done [#allocation6], 2048
    $region29: #{tpu_custom_call.1} parent=1 // pred_fallthru
      _
    // Predicated region
    $region30: #{tpu_custom_call.1} parent=1 // pred_check
      _
    $region31: #{tpu_custom_call.1} parent=1 // pred_check_branch
      %71 = sbr.rel (0) target = $region33
    $region32: #{tpu_custom_call.1} parent=1 // pred_region
      %72 = dma.done [#allocation9], 2048
    $region33: #{tpu_custom_call.1} parent=1 // pred_fallthru
      _
    %v73 = vld [vmem:[#allocation5] sm:$0xff]
    %v74 = vld [vmem:[#allocation5 + $0x8] sm:$0xff]
    %v75 = vld [vmem:[#allocation5 + $0x10] sm:$0xff]
    %v76 = vld [vmem:[#allocation5 + $0x18] sm:$0xff]
    %v77 = vld [vmem:[#allocation5 + $0x20] sm:$0xff]
    %v78 = vld [vmem:[#allocation5 + $0x28] sm:$0xff]
    %v79 = vld [vmem:[#allocation5 + $0x30] sm:$0xff]
    %v80 = vld [vmem:[#allocation5 + $0x38] sm:$0xff]
    %v81 = vld [vmem:[#allocation5 + $0x40] sm:$0xff]
    %v82 = vld [vmem:[#allocation5 + $0x48] sm:$0xff]
    %v83 = vld [vmem:[#allocation5 + $0x50] sm:$0xff]
    %v84 = vld [vmem:[#allocation5 + $0x58] sm:$0xff]
    %v85 = vld [vmem:[#allocation5 + $0x60] sm:$0xff]
    %v86 = vld [vmem:[#allocation5 + $0x68] sm:$0xff]
    %v87 = vld [vmem:[#allocation5 + $0x70] sm:$0xff]
    %v88 = vld [vmem:[#allocation5 + $0x78] sm:$0xff]
    %v89 = vld [vmem:[#allocation7] sm:$0xff]
    %v90 = vld [vmem:[#allocation7 + $0x8] sm:$0xff]
    %v91 = vld [vmem:[#allocation7 + $0x10] sm:$0xff]
    %v92 = vld [vmem:[#allocation7 + $0x18] sm:$0xff]
    %v93 = vld [vmem:[#allocation7 + $0x20] sm:$0xff]
    %v94 = vld [vmem:[#allocation7 + $0x28] sm:$0xff]
    %v95 = vld [vmem:[#allocation7 + $0x30] sm:$0xff]
    %v96 = vld [vmem:[#allocation7 + $0x38] sm:$0xff]
    %v97 = vld [vmem:[#allocation7 + $0x40] sm:$0xff]
    %v98 = vld [vmem:[#allocation7 + $0x48] sm:$0xff]
    %v99 = vld [vmem:[#allocation7 + $0x50] sm:$0xff]
    %v100 = vld [vmem:[#allocation7 + $0x58] sm:$0xff]
    %v101 = vld [vmem:[#allocation7 + $0x60] sm:$0xff]
    %v102 = vld [vmem:[#allocation7 + $0x68] sm:$0xff]
    %v103 = vld [vmem:[#allocation7 + $0x70] sm:$0xff]
    %v104 = vld [vmem:[#allocation7 + $0x78] sm:$0xff]
    %v105 = vld [vmem:[#allocation8] sm:$0xff]
    %v106 = vld [vmem:[#allocation8 + $0x8] sm:$0xff]
    %v107 = vld [vmem:[#allocation8 + $0x10] sm:$0xff]
    %v108 = vld [vmem:[#allocation8 + $0x18] sm:$0xff]
    %v109 = vld [vmem:[#allocation8 + $0x20] sm:$0xff]
    %v110 = vld [vmem:[#allocation8 + $0x28] sm:$0xff]
    %v111 = vld [vmem:[#allocation8 + $0x30] sm:$0xff]
    %v112 = vld [vmem:[#allocation8 + $0x38] sm:$0xff]
    %v113 = vld [vmem:[#allocation8 + $0x40] sm:$0xff]
    %v114 = vld [vmem:[#allocation8 + $0x48] sm:$0xff]
    %v115 = vld [vmem:[#allocation8 + $0x50] sm:$0xff]
    %v116 = vld [vmem:[#allocation8 + $0x58] sm:$0xff]
    %v117 = vld [vmem:[#allocation8 + $0x60] sm:$0xff]
    %v118 = vld [vmem:[#allocation8 + $0x68] sm:$0xff]
    %v119 = vld [vmem:[#allocation8 + $0x70] sm:$0xff]
    %v120 = vld [vmem:[#allocation8 + $0x78] sm:$0xff]
    %v121 = vrcp.pop %v73
    %v122 = vmul.f32 %v89, %v121
    %v123 = vrcp.pop %v74
    %v124 = vmul.f32 %v90, %v123
    %v125 = vrcp.pop %v75
    %v126 = vmul.f32 %v91, %v125
    %v127 = vrcp.pop %v76
    %v128 = vmul.f32 %v92, %v127
    %v129 = vrcp.pop %v77
    %v130 = vmul.f32 %v93, %v129
    %v131 = vrcp.pop %v78
    %v132 = vmul.f32 %v94, %v131
    %v133 = vrcp.pop %v79
    %v134 = vmul.f32 %v95, %v133
    %v135 = vrcp.pop %v80
    %v136 = vmul.f32 %v96, %v135
    %v137 = vrcp.pop %v81
    %v138 = vmul.f32 %v97, %v137
    %v139 = vrcp.pop %v82
    %v140 = vmul.f32 %v98, %v139
    %v141 = vrcp.pop %v83
    %v142 = vmul.f32 %v99, %v141
    %v143 = vrcp.pop %v84
    %v144 = vmul.f32 %v100, %v143
    %v145 = vrcp.pop %v85
    %v146 = vmul.f32 %v101, %v145
    %v147 = vrcp.pop %v86
    %v148 = vmul.f32 %v102, %v147
    %v149 = vrcp.pop %v87
    %v150 = vmul.f32 %v103, %v149
    %v151 = vrcp.pop %v88
    %v152 = vmul.f32 %v104, %v151
    %v153 = vadd.f32 %v122, %v105
    %v154 = vadd.f32 %v124, %v106
    %v155 = vadd.f32 %v126, %v107
    %v156 = vadd.f32 %v128, %v108
    %v157 = vadd.f32 %v130, %v109
    %v158 = vadd.f32 %v132, %v110
    %v159 = vadd.f32 %v134, %v111
    %v160 = vadd.f32 %v136, %v112
    %v161 = vadd.f32 %v138, %v113
    %v162 = vadd.f32 %v140, %v114
    %v163 = vadd.f32 %v142, %v115
    %v164 = vadd.f32 %v144, %v116
    %v165 = vadd.f32 %v146, %v117
    %v166 = vadd.f32 %v148, %v118
    %v167 = vadd.f32 %v150, %v119
    %v168 = vadd.f32 %v152, %v120
    %v169 = vfloor.f32 %v153
    %v170 = vfloor.f32 %v154
    %v171 = vfloor.f32 %v155
    %v172 = vfloor.f32 %v156
    %v173 = vfloor.f32 %v157
    %v174 = vfloor.f32 %v158
    %v175 = vfloor.f32 %v159
    %v176 = vfloor.f32 %v160
    %v177 = vfloor.f32 %v161
    %v178 = vfloor.f32 %v162
    %v179 = vfloor.f32 %v163
    %v180 = vfloor.f32 %v164
    %v181 = vfloor.f32 %v165
    %v182 = vfloor.f32 %v166
    %v183 = vfloor.f32 %v167
    %v184 = vfloor.f32 %v168
    %v185 = vmax.f32 %v169, 0.0
    %v186 = vmax.f32 %v170, 0.0
    %v187 = vmax.f32 %v171, 0.0
    %v188 = vmax.f32 %v172, 0.0
    %v189 = vmax.f32 %v173, 0.0
    %v190 = vmax.f32 %v174, 0.0
    %v191 = vmax.f32 %v175, 0.0
    %v192 = vmax.f32 %v176, 0.0
    %v193 = vmax.f32 %v177, 0.0
    %v194 = vmax.f32 %v178, 0.0
    %v195 = vmax.f32 %v179, 0.0
    %v196 = vmax.f32 %v180, 0.0
    %v197 = vmax.f32 %v181, 0.0
    %v198 = vmax.f32 %v182, 0.0
    %v199 = vmax.f32 %v183, 0.0
    %v200 = vmax.f32 %v184, 0.0
    %v201 = vmin.f32 %v185, 1.0
    %v202 = vmin.f32 %v186, 1.0
    %v203 = vmin.f32 %v187, 1.0
    %v204 = vmin.f32 %v188, 1.0
    %v205 = vmin.f32 %v189, 1.0
    %v206 = vmin.f32 %v190, 1.0
    %v207 = vmin.f32 %v191, 1.0
    %v208 = vmin.f32 %v192, 1.0
    %v209 = vmin.f32 %v193, 1.0
    %v210 = vmin.f32 %v194, 1.0
    %v211 = vmin.f32 %v195, 1.0
    %v212 = vmin.f32 %v196, 1.0
    %v213 = vmin.f32 %v197, 1.0
    %v214 = vmin.f32 %v198, 1.0
    %v215 = vmin.f32 %v199, 1.0
    %v216 = vmin.f32 %v200, 1.0
    %v217 = vld [vmem:[#allocation2] sm:$0xff]
    %v218 = vld [vmem:[#allocation2 + $0x8] sm:$0xff]
    %v219 = vld [vmem:[#allocation2 + $0x10] sm:$0xff]
    %v220 = vld [vmem:[#allocation2 + $0x18] sm:$0xff]
    %v221 = vld [vmem:[#allocation2 + $0x20] sm:$0xff]
    %v222 = vld [vmem:[#allocation2 + $0x28] sm:$0xff]
    %v223 = vld [vmem:[#allocation2 + $0x30] sm:$0xff]
    %v224 = vld [vmem:[#allocation2 + $0x38] sm:$0xff]
    %v225 = vld [vmem:[#allocation2 + $0x40] sm:$0xff]
    %v226 = vld [vmem:[#allocation2 + $0x48] sm:$0xff]
    %v227 = vld [vmem:[#allocation2 + $0x50] sm:$0xff]
    %v228 = vld [vmem:[#allocation2 + $0x58] sm:$0xff]
    %v229 = vld [vmem:[#allocation2 + $0x60] sm:$0xff]
    %v230 = vld [vmem:[#allocation2 + $0x68] sm:$0xff]
    %v231 = vld [vmem:[#allocation2 + $0x70] sm:$0xff]
    %v232 = vld [vmem:[#allocation2 + $0x78] sm:$0xff]
    %v233 = vmul.f32 %v73, %v201
    %v234 = vmul.f32 %v74, %v202
    %v235 = vmul.f32 %v75, %v203
    %v236 = vmul.f32 %v76, %v204
    %v237 = vmul.f32 %v77, %v205
    %v238 = vmul.f32 %v78, %v206
    %v239 = vmul.f32 %v79, %v207
    %v240 = vmul.f32 %v80, %v208
    %v241 = vmul.f32 %v81, %v209
    %v242 = vmul.f32 %v82, %v210
    %v243 = vmul.f32 %v83, %v211
    %v244 = vmul.f32 %v84, %v212
    %v245 = vmul.f32 %v85, %v213
    %v246 = vmul.f32 %v86, %v214
    %v247 = vmul.f32 %v87, %v215
    %v248 = vmul.f32 %v88, %v216
    %v249 = vadd.f32 %v217, %v233
    %v250 = vadd.f32 %v218, %v234
    %v251 = vadd.f32 %v219, %v235
    %v252 = vadd.f32 %v220, %v236
    %v253 = vadd.f32 %v221, %v237
    %v254 = vadd.f32 %v222, %v238
    %v255 = vadd.f32 %v223, %v239
    %v256 = vadd.f32 %v224, %v240
    %v257 = vadd.f32 %v225, %v241
    %v258 = vadd.f32 %v226, %v242
    %v259 = vadd.f32 %v227, %v243
    %v260 = vadd.f32 %v228, %v244
    %v261 = vadd.f32 %v229, %v245
    %v262 = vadd.f32 %v230, %v246
    %v263 = vadd.f32 %v231, %v247
    %v264 = vadd.f32 %v232, %v248
    %265 = vst [vmem:[#allocation10] sm:$0xff] %v249
    %266 = vst [vmem:[#allocation10 + $0x8] sm:$0xff] %v250
    %267 = vst [vmem:[#allocation10 + $0x10] sm:$0xff] %v251
    %268 = vst [vmem:[#allocation10 + $0x18] sm:$0xff] %v252
    %269 = vst [vmem:[#allocation10 + $0x20] sm:$0xff] %v253
    %270 = vst [vmem:[#allocation10 + $0x28] sm:$0xff] %v254
    %271 = vst [vmem:[#allocation10 + $0x30] sm:$0xff] %v255
    %272 = vst [vmem:[#allocation10 + $0x38] sm:$0xff] %v256
    %273 = vst [vmem:[#allocation10 + $0x40] sm:$0xff] %v257
    %274 = vst [vmem:[#allocation10 + $0x48] sm:$0xff] %v258
    %275 = vst [vmem:[#allocation10 + $0x50] sm:$0xff] %v259
    %276 = vst [vmem:[#allocation10 + $0x58] sm:$0xff] %v260
    %277 = vst [vmem:[#allocation10 + $0x60] sm:$0xff] %v261
    %278 = vst [vmem:[#allocation10 + $0x68] sm:$0xff] %v262
    %279 = vst [vmem:[#allocation10 + $0x70] sm:$0xff] %v263
    %280 = vst [vmem:[#allocation10 + $0x78] sm:$0xff] %v264
    // Predicated region
    $region34: #{tpu_custom_call.1} parent=1 // pred_check
      _
    $region35: #{tpu_custom_call.1} parent=1 // pred_check_branch
      %282 = sbr.rel (0) target = $region37
    $region36: #{tpu_custom_call.1} parent=1 // pred_region
      %s284 = ssub.s32 2048, 2048
      %285 = vsyncadd [#allocation4], %s284
      %s286 = sshll.u32 [#allocation10], 4
      %s287 = int_to_ptr.vmem [resolvable:$true] %s286
      %292 = dma.vmem_to_hbm [thread:$0]  %s287, 2048, %s4, [#allocation4], 128, 128, 8
    $region37: #{tpu_custom_call.1} parent=1 // pred_fallthru
      _
    // Predicated region
    $region38: #{tpu_custom_call.1} parent=1 // pred_check
      _
    $region39: #{tpu_custom_call.1} parent=1 // pred_check_branch
      %294 = sbr.rel (0) target = $region41
    $region40: #{tpu_custom_call.1} parent=1 // pred_region
      %295 = dma.done [#allocation4], 2048
    $region41: #{tpu_custom_call.1} parent=1 // pred_fallthru
      _
    %296 = vsyncpa [#allocation3], 1
    %297 = vsyncpa [#allocation6], 1
    %298 = vsyncpa [#allocation9], 1
    %299 = vsyncpa [#allocation4], 1

</llo_original>
